<compile_context>
chip_gen: v7x
topology: tpu7x:2x2x1
jax: 0.10.0
libtpu: 0.0.40
codegen_flags: <defaults>
</compile_context>

<pallas_src>
import functools

import jax
import jax.numpy as jnp
from jax import lax
from jax.experimental import pallas as pl
from jax.experimental.pallas import tpu as pltpu


def _focal_loss_kernel(logits_ref, targets_ref, alpha_ref, out_ref, *,
                       gamma, n_total):
    i = pl.program_id(0)

    x = logits_ref[...].astype(jnp.float32)            # (TILE_N, C)
    tgt = targets_ref[...]                              # (TILE_N, 1) int32
    alpha_row = alpha_ref[...].astype(jnp.float32)      # (1, C)

    tile_n, c = x.shape

    # ---- log-sum-exp over classes (numerically stable, no full-array divide) ----
    m = jnp.max(x, axis=1, keepdims=True)                # (TILE_N, 1)
    e = jnp.exp(x - m)                                   # (TILE_N, C)
    denom = jnp.sum(e, axis=1, keepdims=True)            # (TILE_N, 1)

    # One-hot class mask built in-kernel (replaces torch scatter_).
    col_ids = lax.broadcasted_iota(jnp.int32, (tile_n, c), 1)
    class_mask = (col_ids == tgt).astype(jnp.float32)    # (TILE_N, C)

    # Gather target logit and per-sample alpha with the one-hot mask.
    x_t = jnp.sum(x * class_mask, axis=1, keepdims=True)             # (TILE_N, 1)
    alpha_g = jnp.sum(alpha_row * class_mask, axis=1, keepdims=True)  # (TILE_N, 1)

    log_p = (x_t - m) - jnp.log(denom)                   # log softmax at target
    probs = jnp.exp(log_p)                               # softmax prob at target
    one_minus = jnp.maximum(1.0 - probs, 0.0)            # clamp rounding noise

    # (1 - p)**gamma: explicit multiplies for small integer gamma, else jnp.power.
    g = float(gamma)
    if g == 0.0:
        pow_term = jnp.ones_like(one_minus)
    elif g.is_integer() and 1.0 <= g <= 4.0:
        pow_term = one_minus
        for _ in range(int(g) - 1):
            pow_term = pow_term * one_minus
    else:
        pow_term = jnp.power(one_minus, g)

    batch_loss = -alpha_g * pow_term * log_p             # (TILE_N, 1)

    # Mask rows past the true batch size (last, possibly padded, tile).
    row_ids = lax.broadcasted_iota(jnp.int32, (tile_n, 1), 0) + i * tile_n
    batch_loss = jnp.where(row_ids < n_total, batch_loss, 0.0)
    partial = jnp.sum(batch_loss)

    # Lane-dense (8, 128) output block: partial sum at [0, 0], zeros elsewhere.
    flat_ids = (lax.broadcasted_iota(jnp.int32, (8, 128), 0) * 128
                + lax.broadcasted_iota(jnp.int32, (8, 128), 1))
    out_ref[...] = jnp.where(flat_ids == 0, partial, 0.0)


def _round_up(x, m):
    return ((x + m - 1) // m) * m


def _choose_tile_n(n, c, itemsize):
    # Sublane packing: f32 -> 8, bf16 -> 16, int8/fp8 -> 32.
    sublane = max(8, 32 // max(1, itemsize))
    # Keep one logits buffer <= ~6 MiB so the double-buffered working set stays
    # comfortably inside v7x's 64 MiB physical / 32 MiB scoped VMEM as well.
    budget_bytes = 6 * 1024 * 1024
    max_rows = max(sublane, (budget_bytes // max(1, c * itemsize)) // sublane * sublane)
    tile = min(512, max_rows, _round_up(n, sublane))
    return max(sublane, tile)


def focal_loss(logits, targets, alpha, *, gamma=2.0, size_average=True):
    """logits: (N, C) float (any dtype); targets: (N,) int; alpha: (C,) float."""
    n, c = logits.shape
    itemsize = jnp.dtype(logits.dtype).itemsize

    targets2d = targets.reshape(n, 1).astype(jnp.int32)
    alpha_row = alpha.reshape(1, c).astype(jnp.float32)

    tile_n = _choose_tile_n(n, c, itemsize)
    num_tiles = int(pl.cdiv(n, tile_n))

    kernel = functools.partial(_focal_loss_kernel,
                               gamma=float(gamma),
                               n_total=int(n))

    cost = pl.CostEstimate(
        flops=6 * n * c,
        transcendentals=n * c + 2 * n,
        bytes_accessed=n * c * itemsize + n * 4 + c * 4 + num_tiles * 8 * 128 * 4,
    )

    partials = pl.pallas_call(
        kernel,
        out_shape=jax.ShapeDtypeStruct((num_tiles * 8, 128), jnp.float32),
        grid_spec=pltpu.PrefetchScalarGridSpec(
            num_scalar_prefetch=0,
            grid=(num_tiles,),
            in_specs=[
                pl.BlockSpec((tile_n, c), lambda i: (i, 0)),   # logits, native dtype
                pl.BlockSpec((tile_n, 1), lambda i: (i, 0)),   # targets
                pl.BlockSpec((1, c), lambda i: (0, 0)),        # alpha (replicated)
            ],
            out_specs=pl.BlockSpec((8, 128), lambda i: (i, 0)),
        ),
        compiler_params=pltpu.CompilerParams(
            dimension_semantics=("parallel",),
            vmem_limit_bytes=64 * 1024 * 1024,
        ),
        cost_estimate=cost,
    )(logits, targets2d, alpha_row)

    total = jnp.sum(partials)
    if size_average:
        total = total / jnp.float32(n)
    return total


if __name__ == "__main__":
    key = jax.random.PRNGKey(0)
    k1, k2 = jax.random.split(key)

    N, C = 8, 4                      # batch=8, class_num=4
    logits = jax.random.normal(k1, (N, C), dtype=jnp.float32)
    targets = jax.random.randint(k2, (N,), 0, C, dtype=jnp.int32)
    # FocalLoss.__init__ with alpha=None -> alpha = ones(class_num, 1)
    alpha = jnp.ones((C,), dtype=jnp.float32)

    loss = focal_loss(logits, targets, alpha, gamma=2.0, size_average=True)
    jax.block_until_ready(loss)

    # Pure-JAX reference check (same semantics as the PyTorch forward).
    p_ref = jax.nn.softmax(logits, axis=1)
    probs_ref = jnp.take_along_axis(p_ref, targets[:, None], axis=1)
    loss_ref = jnp.mean(-1.0 * (1.0 - probs_ref) ** 2.0 * jnp.log(probs_ref))
    assert jnp.allclose(loss, loss_ref, rtol=1e-5, atol=1e-5), (loss, loss_ref)

    # Also exercise size_average=False (sum reduction).
    loss_sum = focal_loss(logits, targets, alpha, gamma=2.0, size_average=False)
    jax.block_until_ready(loss_sum)
    loss_sum_ref = jnp.sum(-1.0 * (1.0 - probs_ref) ** 2.0 * jnp.log(probs_ref))
    assert jnp.allclose(loss_sum, loss_sum_ref, rtol=1e-5, atol=1e-5), (loss_sum, loss_sum_ref)

    print("KERNEL_OK")
</pallas_src>

<mosaic_0001>
module attributes {stable_mosaic.version = 11 : i64} {
  func.func @_focal_loss_kernel(%arg0: i32, %arg1: memref<8x4xf32, #tpu.memory_space<vmem>>, %arg2: memref<8x1xi32, #tpu.memory_space<vmem>>, %arg3: memref<1x4xf32, #tpu.memory_space<vmem>>, %arg4: memref<8x128xf32, #tpu.memory_space<vmem>>) attributes {dimension_semantics = [#tpu.dimension_semantics<parallel>], iteration_bounds = array<i64: 1>, scalar_prefetch = 0 : i64, scratch_operands = 0 : i64, tpu.core_type = #tpu.core_type<tc>, window_params = [{transform_indices = @transform_0, window_bounds = array<i64: 8, 4>}, {transform_indices = @transform_1, window_bounds = array<i64: 8, 1>}, {pipeline_mode = #tpu.pipeline_mode<synchronous>, transform_indices = @transform_2, window_bounds = array<i64: 1, 4>}, {transform_indices = @transform_3, window_bounds = array<i64: 8, 128>}]} {
    %c0 = arith.constant 0 : index
    %c0_0 = arith.constant 0 : index
    %0 = vector.load %arg1[%c0, %c0_0] : memref<8x4xf32, #tpu.memory_space<vmem>>, vector<8x4xf32>
    %c0_1 = arith.constant 0 : index
    %c0_2 = arith.constant 0 : index
    %1 = vector.load %arg2[%c0_1, %c0_2] : memref<8x1xi32, #tpu.memory_space<vmem>>, vector<8x1xi32>
    %c0_3 = arith.constant 0 : index
    %c0_4 = arith.constant 0 : index
    %2 = vector.load %arg3[%c0_3, %c0_4] : memref<1x4xf32, #tpu.memory_space<vmem>>, vector<1x4xf32>
    %cst = arith.constant dense<0xFF800000> : vector<8xf32>
    %3 = vector.multi_reduction <maximumf>, %0, %cst [1] : vector<8x4xf32> to vector<8xf32>
    %4 = vector.shape_cast %3 : vector<8xf32> to vector<8x1xf32>
    %5 = vector.broadcast %4 : vector<8x1xf32> to vector<8x4xf32>
    %6 = arith.subf %0, %5 : vector<8x4xf32>
    %7 = math.exp %6 : vector<8x4xf32>
    %cst_5 = arith.constant dense<0.000000e+00> : vector<8xf32>
    %8 = vector.multi_reduction <add>, %7, %cst_5 [1] : vector<8x4xf32> to vector<8xf32>
    %9 = vector.shape_cast %8 : vector<8xf32> to vector<8x1xf32>
    %10 = tpu.iota {dimensions = array<i32: 1>} : vector<8x4xi32>
    %11 = vector.broadcast %1 : vector<8x1xi32> to vector<8x4xi32>
    %12 = arith.cmpi eq, %10, %11 : vector<8x4xi32>
    %13 = arith.extui %12 : vector<8x4xi1> to vector<8x4xi32>
    %14 = arith.sitofp %13 : vector<8x4xi32> to vector<8x4xf32>
    %15 = arith.mulf %0, %14 : vector<8x4xf32>
    %cst_6 = arith.constant dense<0.000000e+00> : vector<8xf32>
    %16 = vector.multi_reduction <add>, %15, %cst_6 [1] : vector<8x4xf32> to vector<8xf32>
    %17 = vector.shape_cast %16 : vector<8xf32> to vector<8x1xf32>
    %18 = vector.broadcast %2 : vector<1x4xf32> to vector<8x4xf32>
    %19 = arith.mulf %18, %14 : vector<8x4xf32>
    %cst_7 = arith.constant dense<0.000000e+00> : vector<8xf32>
    %20 = vector.multi_reduction <add>, %19, %cst_7 [1] : vector<8x4xf32> to vector<8xf32>
    %21 = vector.shape_cast %20 : vector<8xf32> to vector<8x1xf32>
    %22 = arith.subf %17, %4 : vector<8x1xf32>
    %23 = math.log %9 : vector<8x1xf32>
    %24 = arith.subf %22, %23 : vector<8x1xf32>
    %25 = math.exp %24 : vector<8x1xf32>
    %cst_8 = arith.constant 1.000000e+00 : f32
    %26 = vector.broadcast %cst_8 : f32 to vector<8x1xf32>
    %27 = arith.subf %26, %25 : vector<8x1xf32>
    %cst_9 = arith.constant 0.000000e+00 : f32
    %28 = vector.broadcast %cst_9 : f32 to vector<8x1xf32>
    %29 = arith.maximumf %27, %28 : vector<8x1xf32>
    %30 = arith.mulf %29, %29 : vector<8x1xf32>
    %cst_10 = arith.constant 0.000000e+00 : f32
    %31 = vector.broadcast %cst_10 : f32 to vector<8x1xf32>
    %32 = arith.subf %31, %21 : vector<8x1xf32>
    %33 = arith.mulf %32, %30 : vector<8x1xf32>
    %34 = arith.mulf %33, %24 : vector<8x1xf32>
    %35 = tpu.iota {dimensions = array<i32: 0>} : vector<8x1xi32>
    %c8_i32 = arith.constant 8 : i32
    %36 = arith.muli %arg0, %c8_i32 : i32
    %37 = vector.broadcast %36 : i32 to vector<8x1xi32>
    %38 = arith.addi %35, %37 : vector<8x1xi32>
    %c8_i32_11 = arith.constant 8 : i32
    %39 = vector.broadcast %c8_i32_11 : i32 to vector<8x1xi32>
    %40 = arith.cmpi slt, %38, %39 : vector<8x1xi32>
    %cst_12 = arith.constant 0.000000e+00 : f32
    %41 = vector.broadcast %cst_12 : f32 to vector<8x1xf32>
    %42 = arith.select %40, %34, %41 : vector<8x1xi1>, vector<8x1xf32>
    %43 = vector.shape_cast %42 : vector<8x1xf32> to vector<1x8x1xf32>
    %cst_13 = arith.constant dense<0.000000e+00> : vector<1xf32>
    %44 = vector.multi_reduction <add>, %43, %cst_13 [1, 2] : vector<1x8x1xf32> to vector<1xf32>
    %45 = vector.shape_cast %44 : vector<1xf32> to vector<1x1x1xf32>
    %46 = vector.extract %45[0, 0, 0] : f32 from vector<1x1x1xf32>
    %47 = tpu.iota {dimensions = array<i32: 0>} : vector<8x128xi32>
    %c128_i32 = arith.constant 128 : i32
    %48 = vector.broadcast %c128_i32 : i32 to vector<8x128xi32>
    %49 = arith.muli %47, %48 : vector<8x128xi32>
    %50 = tpu.iota {dimensions = array<i32: 1>} : vector<8x128xi32>
    %51 = arith.addi %49, %50 : vector<8x128xi32>
    %c0_i32 = arith.constant 0 : i32
    %52 = vector.broadcast %c0_i32 : i32 to vector<8x128xi32>
    %53 = arith.cmpi eq, %51, %52 : vector<8x128xi32>
    %cst_14 = arith.constant 0.000000e+00 : f32
    %54 = vector.broadcast %46 : f32 to vector<8x128xf32>
    %55 = vector.broadcast %cst_14 : f32 to vector<8x128xf32>
    %56 = arith.select %53, %54, %55 : vector<8x128xi1>, vector<8x128xf32>
    %c0_15 = arith.constant 0 : index
    %c0_16 = arith.constant 0 : index
    %57 = vector.load %arg4[%c0_15, %c0_16] : memref<8x128xf32, #tpu.memory_space<vmem>>, vector<8x128xf32>
    tpu.vector_store %arg4[%c0_15, %c0_16], %56 {strides = array<i32>} : memref<8x128xf32, #tpu.memory_space<vmem>>, vector<8x128xf32>,
    return
  }
  func.func @transform_0(%arg0: i32) -> (i32, i32) {
    %c0_i32 = arith.constant 0 : i32
    %c0_i32_0 = arith.constant 0 : i32
    return %arg0, %c0_i32 : i32, i32
  }
  func.func @transform_1(%arg0: i32) -> (i32, i32) {
    %c0_i32 = arith.constant 0 : i32
    %c0_i32_0 = arith.constant 0 : i32
    return %arg0, %c0_i32 : i32, i32
  }
  func.func @transform_2(%arg0: i32) -> (i32, i32) {
    %c0_i32 = arith.constant 0 : i32
    %c0_i32_0 = arith.constant 0 : i32
    %c0_i32_1 = arith.constant 0 : i32
    return %c0_i32, %c0_i32_0 : i32, i32
  }
  func.func @transform_3(%arg0: i32) -> (i32, i32) {
    %c0_i32 = arith.constant 0 : i32
    %c0_i32_0 = arith.constant 0 : i32
    return %arg0, %c0_i32 : i32, i32
  }
}

</mosaic_0001>

<llo_original>
// kernel: tpu_custom_call.1
$region0: #{tpu_custom_call.1}
  #allocation0 [shape = 'u32[]', space=smem, size = 0x4, offset = 0x4, fixed_abs, tag = 'smem constant byte address 0x4 - core index']
  #allocation1 [shape = 'u32[144,128]{1,0:T(1,128)}', space=vmem, size = 0x12000, scoped, tag = 'internal scratch']
  %s0 = inlined_call_operand.hbm [shape: f32[8,4], index: 0, kind: input, shape index: {}]
  %s1 = inlined_call_operand.hbm [shape: s32[8,1], index: 1, kind: input, shape index: {}]
  %s2 = inlined_call_operand.hbm [shape: f32[1,4], index: 2, kind: input, shape index: {}]
  %s3 = inlined_call_operand.hbm [shape: f32[8,128], index: 3, kind: output, shape index: {}]
  %s4 = sld [smem:[#allocation0]]
  $region34: #{tpu_custom_call.1} parent=0
    _
  %s6 = ssub.s32 1, %s4
  %s7 = scalar_select 0, %s6, %s4
  $region1: #{tpu_custom_call.1} parent=0
    #allocation2 [shape = 'u8[4096]{0}', space=vmem, size = 0x1000, scoped, tag = 'input window, operand 0, single buffered']
    #allocation3 [shape = 's32[1]{0}', space=sflag, size = 0x4, scoped, tag = 'scoped memory for tpu_custom_call.1']
    #allocation4 [shape = 's32[1]{0}', space=sflag, size = 0x4, scoped, tag = 'scoped memory for tpu_custom_call.1']
    #allocation5 [shape = 'u8[4096]{0}', space=vmem, size = 0x1000, scoped, tag = 'input window, operand 1, single buffered']
    #allocation6 [shape = 's32[1]{0}', space=sflag, size = 0x4, scoped, tag = 'scoped memory for tpu_custom_call.1']
    #allocation7 [shape = 'u8[512]{0}', space=vmem, size = 0x400, scoped, tag = 'input window, operand 2, single buffered']
    #allocation8 [shape = 'u8[4096]{0}', space=vmem, size = 0x1000, scoped, tag = 'output window, operand 0, single buffered']
    %8 = vsyncpa [#allocation3], 0
    %9 = vsyncpa [#allocation6], 0
    %10 = vsyncpa [#allocation4], 0
    // Predicated region
    $region2: #{tpu_custom_call.1} parent=1 // pred_check
      _
    $region3: #{tpu_custom_call.1} parent=1 // pred_check_branch
      %12 = sbr.rel (0) target = $region5
    $region4: #{tpu_custom_call.1} parent=1 // pred_region
      %s14 = ssub.s32 128, 128
      %15 = vsyncadd [#allocation3], %s14
      %s17 = sshll.u32 [#allocation2], 4
      %s18 = int_to_ptr.vmem [resolvable:$true] %s17
      %20 = dma.hbm_to_vmem [thread:$0]  %s0, 128, %s18, [#allocation3]
    $region5: #{tpu_custom_call.1} parent=1 // pred_fallthru
      _
    // Predicated region
    $region6: #{tpu_custom_call.1} parent=1 // pred_check
      _
    $region7: #{tpu_custom_call.1} parent=1 // pred_check_branch
      %22 = sbr.rel (0) target = $region9
    $region8: #{tpu_custom_call.1} parent=1 // pred_region
      %s24 = ssub.s32 128, 128
      %25 = vsyncadd [#allocation6], %s24
      %s27 = sshll.u32 [#allocation5], 4
      %s28 = int_to_ptr.vmem [resolvable:$true] %s27
      %30 = dma.hbm_to_vmem [thread:$0]  %s1, 128, %s28, [#allocation6]
    $region9: #{tpu_custom_call.1} parent=1 // pred_fallthru
      _
    // Predicated region
    $region10: #{tpu_custom_call.1} parent=1 // pred_check
      _
    $region11: #{tpu_custom_call.1} parent=1 // pred_check_branch
      %32 = sbr.rel (0) target = $region13
    $region12: #{tpu_custom_call.1} parent=1 // pred_region
      %s34 = ssub.s32 16, 16
      %35 = vsyncadd [#allocation6], %s34
      %s37 = sshll.u32 [#allocation7], 4
      %s38 = int_to_ptr.vmem [resolvable:$true] %s37
      %40 = dma.hbm_to_vmem [thread:$0]  %s2, 16, %s38, [#allocation6]
    $region13: #{tpu_custom_call.1} parent=1 // pred_fallthru
      _
    // Predicated region
    $region14: #{tpu_custom_call.1} parent=1 // pred_check
      _
    $region15: #{tpu_custom_call.1} parent=1 // pred_check_branch
      %42 = sbr.rel (0) target = $region17
    $region16: #{tpu_custom_call.1} parent=1 // pred_region
      %43 = dma.done [#allocation3], 128
    $region17: #{tpu_custom_call.1} parent=1 // pred_fallthru
      _
    // Predicated region
    $region18: #{tpu_custom_call.1} parent=1 // pred_check
      _
    $region19: #{tpu_custom_call.1} parent=1 // pred_check_branch
      %45 = sbr.rel (0) target = $region21
    $region20: #{tpu_custom_call.1} parent=1 // pred_region
      %46 = dma.done [#allocation6], 128
    $region21: #{tpu_custom_call.1} parent=1 // pred_fallthru
      _
    // Predicated region
    $region22: #{tpu_custom_call.1} parent=1 // pred_check
      _
    $region23: #{tpu_custom_call.1} parent=1 // pred_check_branch
      %48 = sbr.rel (0) target = $region25
    $region24: #{tpu_custom_call.1} parent=1 // pred_region
      %49 = dma.done [#allocation6], 16
    $region25: #{tpu_custom_call.1} parent=1 // pred_fallthru
      _
    %v50 = vld [vmem:[#allocation2] sm:$0xff]
    %v51 = vld [vmem:[#allocation5] sm:$0xff]
    %v52 = vld [vmem:[#allocation7] sm:$0x1]
    %vm53 = vcmask 31744
    %v54 = vsel %vm53, %v50, -inf
    %55 = vmax.xlane.f32.xlu0 %v54
    %v56 = vpop.xlane.xlu0 %55
    %v57 = vsub.f32 %v50, %v56
    %v58 = vmul.f32 %v57, 1.442695
    %v59 = vpow.pop %v58
    %v60 = vsel %vm53, %v59, 0.0
    %61 = vadd.xlane.f32.xlu0 %v60
    %v62 = vpop.xlane.xlu0 %61
    %v63 = vlaneseq
    %v64 = vand.u32 %v63, 127
    %65 = vset.pattern.permute.xlu0 0
    %66 = vperm.xlu0 %65, %v51
    %v67 = vpop.permute.xlu0 %66
    %vm68 = vcmp.eq.s32.totalorder %v64, %v67
    %v69 = vsel %vm68, 1, 0
    %v70 = vcvt.s32.f32 %v69
    %v71 = vmul.f32 %v50, %v70
    %v72 = vsel %vm53, %v71, 0.0
    %73 = vadd.xlane.f32.xlu0 %v72
    %v74 = vpop.xlane.xlu0 %73
    %v76 = vlaneseq
    %v77 = vshrl.u32 %v76, 7
    %v78 = vsub.s32 0, %v77
    %v79 = vrot.slane %v52, %v78
    %v81 = vmul.f32 %v79, %v70
    %v82 = vsel %vm53, %v81, 0.0
    %83 = vadd.xlane.f32.xlu0 %v82
    %v84 = vpop.xlane.xlu0 %83
    %v85 = vsub.f32 %v74, %v56
    %v86 = vlog2.pop %v62
    %v87 = vmul.f32 %v86, 0.6931472
    %v88 = vsub.f32 %v85, %v87
    %v89 = vmul.f32 %v88, 1.442695
    %v90 = vpow.pop %v89
    %v91 = vsub.f32 1.0, %v90
    %v92 = vmax.f32 %v91, 0.0
    %v93 = vmul.f32 %v92, %v92
    %v94 = vsub.f32 0.0, %v84
    %v95 = vmul.f32 %v94, %v93
    %v96 = vmul.f32 %v95, %v88
    %v97 = vlaneseq
    %v98 = vshrl.u32 %v97, 7
    %s99 = smul.u32 0, 8
    %v100 = vstv %s99
    %v101 = vadd.s32 %v98, %v100
    %vm102 = vcmp.lt.s32.totalorder %v101, 8
    %v103 = vsel %vm102, %v96, 0.0
    %vm104 = vcmask 7168
    %v105 = vsel %vm104, %v103, 0.0
    %106 = vadd.xlane.f32.xlu0 %v105
    %v107 = vpop.xlane.xlu0 %106
    %v108 = vrot.slane %v107, 4
    %v109 = vadd.f32 %v107, %v108
    %v110 = vrot.slane %v109, 2
    %v111 = vadd.f32 %v109, %v110
    %v112 = vrot.slane %v111, 1
    %v113 = vadd.f32 %v111, %v112
    %s114 = vtos %v113
    %v115 = vmul.u32 %v98, 128
    %v116 = vadd.s32 %v115, %v64
    %vm117 = vcmp.eq.s32.totalorder %v116, 0
    %v118 = vstv %s114
    %v119 = vsel %vm117, %v118, 0.0
    %120 = vst [vmem:[#allocation8] sm:$0xff] %v119
    // Predicated region
    $region26: #{tpu_custom_call.1} parent=1 // pred_check
      _
    $region27: #{tpu_custom_call.1} parent=1 // pred_check_branch
      %122 = sbr.rel (0) target = $region29
    $region28: #{tpu_custom_call.1} parent=1 // pred_region
      %s124 = ssub.s32 128, 128
      %125 = vsyncadd [#allocation4], %s124
      %s127 = sshll.u32 [#allocation8], 4
      %s128 = int_to_ptr.vmem [resolvable:$true] %s127
      %130 = dma.vmem_to_hbm [thread:$0]  %s128, 128, %s3, [#allocation4]
    $region29: #{tpu_custom_call.1} parent=1 // pred_fallthru
      _
    // Predicated region
    $region30: #{tpu_custom_call.1} parent=1 // pred_check
      _
    $region31: #{tpu_custom_call.1} parent=1 // pred_check_branch
      %132 = sbr.rel (0) target = $region33
    $region32: #{tpu_custom_call.1} parent=1 // pred_region
      %133 = dma.done [#allocation4], 128
    $region33: #{tpu_custom_call.1} parent=1 // pred_fallthru
      _
    %134 = vsyncpa [#allocation3], 1
    %135 = vsyncpa [#allocation6], 1
    %136 = vsyncpa [#allocation4], 1

</llo_original>
